<compile_context>
chip_gen: v7x
topology: tpu7x:2x2x1
jax: 0.10.0
libtpu: 0.0.40
codegen_flags: <defaults>
</compile_context>

<pallas_src>
import jax
import jax.numpy as jnp
from jax.experimental import pallas as pl
from jax.experimental.pallas import tpu as pltpu

LANES = 512            # lane-dense slab width (multiple of 128)
MAX_BLOCK_ROWS = 1024  # (1024, 512) f32 block = 2 MiB; double-buffered = 4 MiB (fits v5e/v6e/v7x)
ROW_ALIGN = 32         # sublane alignment legal for f32 / bf16 / int8 packing
NUM_SHARDS = 2         # leading "parallel" axis -> both TCs on v7x; no-op cost on v5e/v6e


def _round_up(n, m):
    return ((n + m - 1) // m) * m


def _sumsq_kernel(x_ref, acc_ref):
    """Accumulate sum(x^2) of one shard into a resident (8, LANES) f32 block.

    grid = (NUM_SHARDS, blocks_per_shard); axis 0 "parallel", axis 1 "arbitrary"
    (reduction). acc_ref's block index depends only on the shard index, so it
    stays resident in VMEM across the whole inner reduction axis.
    """
    i = pl.program_id(1)

    @pl.when(i == 0)
    def _():
        acc_ref[...] = jnp.zeros_like(acc_ref)

    x = x_ref[...].astype(jnp.float32)
    sq = x * x
    rows = sq.shape[0]  # static block_rows, multiple of 32
    # Fold the (rows, LANES) tile into the (8, LANES) accumulator with plain
    # element-wise VPU adds (the reshape only groups whole (8, LANES) vreg
    # tiles; no cross-lane/sublane movement). The single cross-lane reduce
    # happens once, in the wrapper.
    acc_ref[...] += jnp.sum(sq.reshape(rows // 8, 8, LANES), axis=0)


def regularize_layer(x, weight):
    """RegularizeLayer forward: returns (output, loss).

    output == x (identity pass-through; no extra HBM copy is made),
    loss = 0.5 * weight * sum(x**2), accumulated in f32.
    """
    flat = x.reshape(-1)
    n = flat.shape[0]

    rows_needed = max(pl.cdiv(n, LANES), 1)
    block_rows = min(MAX_BLOCK_ROWS, _round_up(rows_needed, ROW_ALIGN))
    chunk_rows = NUM_SHARDS * block_rows
    padded_rows = _round_up(rows_needed, chunk_rows)
    n_pad = padded_rows * LANES

    if n_pad != n:
        # Zero padding does not change sum(x^2); only taken when the element
        # count is not already a multiple of the (shards * block) chunk.
        flat = jnp.pad(flat, (0, n_pad - n))
    x2d = flat.reshape(padded_rows, LANES)

    blocks_per_shard = padded_rows // chunk_rows

    partials = pl.pallas_call(
        _sumsq_kernel,
        out_shape=jax.ShapeDtypeStruct((NUM_SHARDS * 8, LANES), jnp.float32),
        grid_spec=pltpu.PrefetchScalarGridSpec(
            num_scalar_prefetch=0,
            grid=(NUM_SHARDS, blocks_per_shard),
            in_specs=[
                pl.BlockSpec(
                    (block_rows, LANES),
                    lambda s, i: (s * blocks_per_shard + i, 0),
                )
            ],
            out_specs=pl.BlockSpec((8, LANES), lambda s, i: (s, 0)),
        ),
        compiler_params=pltpu.CompilerParams(
            dimension_semantics=("parallel", "arbitrary"),
            vmem_limit_bytes=32 << 20,
        ),
    )(x2d)

    # Final tiny reduce + scaling in the wrapper: keeps `weight` out of the
    # compiled kernel (no recompile per weight, works when weight is traced).
    loss = 0.5 * weight * jnp.sum(partials)

    # .clone() semantics: output is value-identical to the input; returning x
    # avoids a full extra HBM read+write of the tensor.
    return x, loss


if __name__ == "__main__":
    key = jax.random.PRNGKey(0)
    # small NCHW input consistent with a conv feature map
    x = jax.random.normal(key, (2, 4, 16, 16), dtype=jnp.float32)
    weight = 1e-3  # module's deterministic regularization weight `w`

    fwd = jax.jit(regularize_layer)
    out, loss = fwd(x, weight)
    out, loss = jax.block_until_ready((out, loss))

    # sanity checks vs. pure-JAX reference
    ref_loss = 0.5 * weight * jnp.sum(x.astype(jnp.float32) ** 2)
    assert out.shape == x.shape and out.dtype == x.dtype
    assert jnp.allclose(out, x), "output must be an identity copy of input"
    assert jnp.allclose(loss, ref_loss, rtol=1e-5, atol=1e-6), (loss, ref_loss)

    print("KERNEL_OK")
</pallas_src>

<mosaic_0001>
module attributes {stable_mosaic.version = 11 : i64} {
  func.func @_sumsq_kernel(%arg0: i32, %arg1: i32, %arg2: memref<32x512xf32, #tpu.memory_space<vmem>>, %arg3: memref<8x512xf32, #tpu.memory_space<vmem>>) attributes {dimension_semantics = [#tpu.dimension_semantics<parallel>, #tpu.dimension_semantics<arbitrary>], iteration_bounds = array<i64: 2, 1>, scalar_prefetch = 0 : i64, scratch_operands = 0 : i64, tpu.core_type = #tpu.core_type<tc>, window_params = [{transform_indices = @transform_0, window_bounds = array<i64: 32, 512>}, {transform_indices = @transform_1, window_bounds = array<i64: 8, 512>}]} {
    %c0_i32 = arith.constant 0 : i32
    %0 = arith.cmpi eq, %arg1, %c0_i32 : i32
    %1 = arith.extui %0 : i1 to i32
    %c0_i32_0 = arith.constant 0 : i32
    %2 = arith.cmpi ne, %1, %c0_i32_0 : i32
    scf.if %2 {
      %cst_6 = arith.constant 0.000000e+00 : f32
      %10 = vector.broadcast %cst_6 : f32 to vector<8x512xf32>
      %c0_7 = arith.constant 0 : index
      %c0_8 = arith.constant 0 : index
      %11 = vector.load %arg3[%c0_7, %c0_8] : memref<8x512xf32, #tpu.memory_space<vmem>>, vector<8x512xf32>
      tpu.vector_store %arg3[%c0_7, %c0_8], %10 {strides = array<i32>} : memref<8x512xf32, #tpu.memory_space<vmem>>, vector<8x512xf32>,
    } else {
    }
    %c0 = arith.constant 0 : index
    %c0_1 = arith.constant 0 : index
    %3 = vector.load %arg2[%c0, %c0_1] : memref<32x512xf32, #tpu.memory_space<vmem>>, vector<32x512xf32>
    %4 = arith.mulf %3, %3 : vector<32x512xf32>
    %c0_2 = arith.constant 0 : index
    %c0_3 = arith.constant 0 : index
    %5 = vector.load %arg3[%c0_2, %c0_3] : memref<8x512xf32, #tpu.memory_space<vmem>>, vector<8x512xf32>
    %6 = vector.shape_cast %4 : vector<32x512xf32> to vector<4x8x512xf32>
    %cst = arith.constant dense<0.000000e+00> : vector<8x512xf32>
    %7 = vector.multi_reduction <add>, %6, %cst [0] : vector<4x8x512xf32> to vector<8x512xf32>
    %8 = arith.addf %5, %7 : vector<8x512xf32>
    %c0_4 = arith.constant 0 : index
    %c0_5 = arith.constant 0 : index
    %9 = vector.load %arg3[%c0_4, %c0_5] : memref<8x512xf32, #tpu.memory_space<vmem>>, vector<8x512xf32>
    tpu.vector_store %arg3[%c0_4, %c0_5], %8 {strides = array<i32>} : memref<8x512xf32, #tpu.memory_space<vmem>>, vector<8x512xf32>,
    return
  }
  func.func @transform_0(%arg0: i32, %arg1: i32) -> (i32, i32) {
    %c1_i32 = arith.constant 1 : i32
    %0 = arith.muli %arg0, %c1_i32 : i32
    %1 = arith.addi %0, %arg1 : i32
    %c0_i32 = arith.constant 0 : i32
    %c0_i32_0 = arith.constant 0 : i32
    return %1, %c0_i32 : i32, i32
  }
  func.func @transform_1(%arg0: i32, %arg1: i32) -> (i32, i32) {
    %c0_i32 = arith.constant 0 : i32
    %c0_i32_0 = arith.constant 0 : i32
    return %arg0, %c0_i32 : i32, i32
  }
}

</mosaic_0001>

<llo_original>
// kernel: regularize_layer.1
$region0: #{regularize_layer.1}
  #allocation0 [shape = 'u32[]', space=smem, size = 0x4, offset = 0x4, fixed_abs, tag = 'smem constant byte address 0x4 - core index']
  #allocation1 [shape = 'u32[144,128]{1,0:T(1,128)}', space=vmem, size = 0x12000, scoped, tag = 'internal scratch']
  %s0 = inlined_call_operand.vmem [shape: f32[64,512], index: 0, kind: input, shape index: {}]
  %s1 = inlined_call_operand.vmem [shape: f32[16,512], index: 1, kind: output, shape index: {}]
  %s2 = sld [smem:[#allocation0]]
  $region41: #{regularize_layer.1} parent=0
    _
  %s4 = ssub.s32 1, %s2
  %s5 = scalar_select 0, %s4, %s2
  loop: start=0, step=1, limit=4
  $region2: #{regularize_layer.1} parent=0 // loop_pre_header
    _
  $region3: #{regularize_layer.1} parent=0 // loop_header
    %s7 = sphi 0, %s11
    %p8 = scmp.ge.s32.totalorder %s7, 4
    %s14 = sphi 0, %s26
    %s15 = sphi 0, %s22
    %s16 = sphi 0, %s14
    %s17 = sphi 0, %s15
    %s18 = sphi 0, %s16
    %s19 = sphi 0, %s17
    %s31 = sphi 0, %s33
    %s34 = sphi 0, %s31
    %s35 = sphi 0, %s34
    %s51 = sphi 0, %s35
    %s57 = sphi 0, %s59
    %s60 = sphi 0, %s57
    %s61 = sphi 0, %s60
    %s77 = sphi 0, %s61
  $region4: #{regularize_layer.1} parent=0 // loop_header_branch
    %10 = sbr.rel (%p8) target = $region8
  $region5: #{regularize_layer.1} parent=0 // loop_body
    %s12 = ssub.s32 %s7, 1
    %s13 = ssub.s32 %s7, 2
    %s20 = sadd.s32 1, %s15
    %p21 = scmp.ge.s32.totalorder %s20, 1
    %s22 = scalar_select %p21, 0, %s20
    %s23 = sadd.s32 1, %s14
    %s24 = scalar_select %p21, %s23, %s14
    %p25 = scmp.ge.s32.totalorder %s24, 2
    %s26 = scalar_select %p25, 0, %s24
    %s27 = sadd.s32 %s14, %s15
    %s28 = sadd.s32 %s26, %s22
    %s29 = ssub.s32 %s27, %s28
    %p30 = scmp.eq.s32.totalorder %s29, 0
    %s32 = sadd.s32 %s31, 1
    %s33 = scalar_select %p30, %s31, %s32
    %p36 = pneg %p30
    %p37 = scmp.eq.s32.totalorder %s7, 1
    %p38 = por %p36, %p37
    %p39 = scmp.ne.s32.totalorder %s31, %s34
    %p40 = scmp.eq.s32.totalorder %s7, 0
    %p41 = por %p39, %p40
    %p42 = scmp.ne.s32.totalorder %s31, %s34
    %p43 = scmp.eq.s32.totalorder %s12, 1
    %p44 = por %p42, %p43
    %p45 = scmp.ne.s32.totalorder %s34, %s35
    %p46 = scmp.eq.s32.totalorder %s12, 0
    %p47 = por %p45, %p46
    %p48 = scmp.ne.s32.totalorder %s34, %s35
    %p49 = scmp.eq.s32.totalorder %s13, 1
    %p50 = por %p48, %p49
    %p52 = scmp.ne.s32.totalorder %s35, %s51
    %p53 = scmp.eq.s32.totalorder %s13, 0
    %p54 = por %p52, %p53
    %s55 = ssub.s32 %s14, %s26
    %p56 = scmp.eq.s32.totalorder %s55, 0
    %s58 = sadd.s32 %s57, 1
    %s59 = scalar_select %p56, %s57, %s58
    %p62 = pneg %p56
    %p63 = scmp.eq.s32.totalorder %s7, 1
    %p64 = por %p62, %p63
    %p65 = scmp.ne.s32.totalorder %s57, %s60
    %p66 = scmp.eq.s32.totalorder %s7, 0
    %p67 = por %p65, %p66
    %p68 = scmp.ne.s32.totalorder %s57, %s60
    %p69 = scmp.eq.s32.totalorder %s12, 1
    %p70 = por %p68, %p69
    %p71 = scmp.ne.s32.totalorder %s60, %s61
    %p72 = scmp.eq.s32.totalorder %s12, 0
    %p73 = por %p71, %p72
    %p74 = scmp.ne.s32.totalorder %s60, %s61
    %p75 = scmp.eq.s32.totalorder %s13, 1
    %p76 = por %p74, %p75
    %p78 = scmp.ne.s32.totalorder %s61, %s77
    %p79 = scmp.eq.s32.totalorder %s13, 0
    %p80 = por %p78, %p79
    %p81 = scmp.le.s32.totalorder 1, %s7
    %p82 = scmp.lt.s32.totalorder %s7, 3
    %p83 = pnand %p81, %p82
    %p84 = pneg %p83
    // Predicated region
    $region9: #{regularize_layer.1} parent=5 // pred_check
      _
    $region10: #{regularize_layer.1} parent=5 // pred_check_branch
      %86 = sbr.rel (%p83) target = $region12
    $region11: #{regularize_layer.1} parent=5 // pred_region
      %s87 = ssub.s32 %s7, 1
    $region12: #{regularize_layer.1} parent=5 // pred_fallthru
      _
    %p88 = scmp.lt.s32.totalorder %s7, 2
    // Predicated region
    $region13: #{regularize_layer.1} parent=5 // pred_check
      %p89 = pneg %p88
    $region14: #{regularize_layer.1} parent=5 // pred_check_branch
      %91 = sbr.rel (%p89) target = $region16
    $region15: #{regularize_layer.1} parent=5 // pred_region
      // Predicated region
      $region17: #{regularize_layer.1} parent=15 // pred_check
        %p92 = pneg %p41
      $region18: #{regularize_layer.1} parent=15 // pred_check_branch
        %94 = sbr.rel (%p92) target = $region20
      $region19: #{regularize_layer.1} parent=15 // pred_region
        %s95 = sadd.s32 %s14, %s15
        %s96 = smul.u32 4, %s95
        %p97 = scmp.lt.s32.totalorder %s96, 7
        %s98 = scalar_select %p97, %s96, 7
        %s99 = smul.addr %s98, 4
        %s100 = smul.addr %s99, 8
        %s101 = scalar_lea.vmem %s0, %s100
        %s102 = sadd.s32 %s14, %s15
        %s103 = smul.u32 4, %s102
      $region20: #{regularize_layer.1} parent=15 // pred_fallthru
        _
    $region16: #{regularize_layer.1} parent=5 // pred_fallthru
      _
    %p104 = scmp.le.s32.totalorder 1, %s7
    %p105 = scmp.lt.s32.totalorder %s7, 3
    %p106 = pnand %p104, %p105
    %p107 = pneg %p106
    // Predicated region
    $region21: #{regularize_layer.1} parent=5 // pred_check
      _
    $region22: #{regularize_layer.1} parent=5 // pred_check_branch
      %109 = sbr.rel (%p106) target = $region24
    $region23: #{regularize_layer.1} parent=5 // pred_region
      %s110 = ssub.s32 %s7, 1
      %s111 = sadd.s32 %s16, %s17
      %s112 = smul.u32 4, %s111
      %p113 = scmp.lt.s32.totalorder %s112, 7
      %s114 = scalar_select %p113, %s112, 7
      %s115 = smul.addr %s114, 4
      %s116 = smul.addr %s115, 8
      %s117 = scalar_lea.vmem %s0, %s116
      %p118 = pneg %p47
      %p119 = pneg %p44
      %p120 = pneg %p73
      %p121 = pneg %p70
      %p122 = scmp.lt.s32.totalorder %s16, 1
      %s123 = scalar_select %p122, %s16, 1
      %s124 = smul.addr %s123, 4
      %s125 = smul.addr %s124, 8
      %s126 = scalar_lea.vmem %s1, %s125
      %s127 = sadd.s32 %s16, %s17
      %s128 = smul.u32 4, %s127
      %p129 = scmp.lt.s32.totalorder %s128, 7
      %s130 = scalar_select %p129, %s128, 7
      %s131 = smul.addr %s130, 4
      %s132 = smul.addr %s131, 8
      %s133 = scalar_lea.vmem %s0, %s132
      %s134 = sadd.s32 %s16, %s17
      %s135 = smul.u32 4, %s134
      %p136 = scmp.lt.s32.totalorder %s16, 1
      %s137 = scalar_select %p136, %s16, 1
      %s138 = smul.addr %s137, 4
      %s139 = smul.addr %s138, 8
      %s140 = scalar_lea.vmem %s1, %s139
      %p141 = scmp.eq.s32.totalorder %s17, 0
      // Predicated region
      $region25: #{regularize_layer.1} parent=23 // pred_check
        %p142 = pneg %p141
      $region26: #{regularize_layer.1} parent=23 // pred_check_branch
        %144 = sbr.rel (%p142) target = $region28
      $region27: #{regularize_layer.1} parent=23 // pred_region
        %145 = vst [vmem:[%s140] sm:$0xff] 0.0
        %146 = vst [vmem:[%s140 + $0x8] sm:$0xff] 0.0
        %147 = vst [vmem:[%s140 + $0x10] sm:$0xff] 0.0
        %148 = vst [vmem:[%s140 + $0x18] sm:$0xff] 0.0
      $region28: #{regularize_layer.1} parent=23 // pred_fallthru
        _
      %v149 = vld [vmem:[%s133] sm:$0xff]
      %v150 = vld [vmem:[%s133 + $0x8] sm:$0xff]
      %v151 = vld [vmem:[%s133 + $0x10] sm:$0xff]
      %v152 = vld [vmem:[%s133 + $0x18] sm:$0xff]
      %v153 = vld [vmem:[%s133 + $0x20] sm:$0xff]
      %v154 = vld [vmem:[%s133 + $0x28] sm:$0xff]
      %v155 = vld [vmem:[%s133 + $0x30] sm:$0xff]
      %v156 = vld [vmem:[%s133 + $0x38] sm:$0xff]
      %v157 = vld [vmem:[%s133 + $0x40] sm:$0xff]
      %v158 = vld [vmem:[%s133 + $0x48] sm:$0xff]
      %v159 = vld [vmem:[%s133 + $0x50] sm:$0xff]
      %v160 = vld [vmem:[%s133 + $0x58] sm:$0xff]
      %v161 = vld [vmem:[%s133 + $0x60] sm:$0xff]
      %v162 = vld [vmem:[%s133 + $0x68] sm:$0xff]
      %v163 = vld [vmem:[%s133 + $0x70] sm:$0xff]
      %v164 = vld [vmem:[%s133 + $0x78] sm:$0xff]
      %v165 = vmul.f32 %v149, %v149
      %v166 = vmul.f32 %v150, %v150
      %v167 = vmul.f32 %v151, %v151
      %v168 = vmul.f32 %v152, %v152
      %v169 = vmul.f32 %v153, %v153
      %v170 = vmul.f32 %v154, %v154
      %v171 = vmul.f32 %v155, %v155
      %v172 = vmul.f32 %v156, %v156
      %v173 = vmul.f32 %v157, %v157
      %v174 = vmul.f32 %v158, %v158
      %v175 = vmul.f32 %v159, %v159
      %v176 = vmul.f32 %v160, %v160
      %v177 = vmul.f32 %v161, %v161
      %v178 = vmul.f32 %v162, %v162
      %v179 = vmul.f32 %v163, %v163
      %v180 = vmul.f32 %v164, %v164
      %v181 = vld [vmem:[%s140] sm:$0xff]
      %v182 = vld [vmem:[%s140 + $0x8] sm:$0xff]
      %v183 = vld [vmem:[%s140 + $0x10] sm:$0xff]
      %v184 = vld [vmem:[%s140 + $0x18] sm:$0xff]
      %v185 = vadd.f32 %v165, %v169
      %v186 = vadd.f32 %v185, %v173
      %v187 = vadd.f32 %v186, %v177
      %v188 = vadd.f32 %v166, %v170
      %v189 = vadd.f32 %v188, %v174
      %v190 = vadd.f32 %v189, %v178
      %v191 = vadd.f32 %v167, %v171
      %v192 = vadd.f32 %v191, %v175
      %v193 = vadd.f32 %v192, %v179
      %v194 = vadd.f32 %v168, %v172
      %v195 = vadd.f32 %v194, %v176
      %v196 = vadd.f32 %v195, %v180
      %v197 = vadd.f32 %v181, %v187
      %v198 = vadd.f32 %v182, %v190
      %v199 = vadd.f32 %v183, %v193
      %v200 = vadd.f32 %v184, %v196
      %201 = vst [vmem:[%s140] sm:$0xff] %v197
      %202 = vst [vmem:[%s140 + $0x8] sm:$0xff] %v198
      %203 = vst [vmem:[%s140 + $0x10] sm:$0xff] %v199
      %204 = vst [vmem:[%s140 + $0x18] sm:$0xff] %v200
      %p205 = scmp.lt.s32.totalorder %s16, 1
      %s206 = scalar_select %p205, %s16, 1
      %s207 = smul.addr %s206, 4
      %s208 = smul.addr %s207, 8
      %s209 = scalar_lea.vmem %s1, %s208
      // Predicated region
      $region29: #{regularize_layer.1} parent=23 // pred_check
        %p210 = pneg %p70
      $region30: #{regularize_layer.1} parent=23 // pred_check_branch
        %212 = sbr.rel (%p210) target = $region32
      $region31: #{regularize_layer.1} parent=23 // pred_region
        _
      $region32: #{regularize_layer.1} parent=23 // pred_fallthru
        _
    $region24: #{regularize_layer.1} parent=5 // pred_fallthru
      _
    %p213 = scmp.le.s32.totalorder 2, %s7
    // Predicated region
    $region33: #{regularize_layer.1} parent=5 // pred_check
      %p214 = pneg %p213
    $region34: #{regularize_layer.1} parent=5 // pred_check_branch
      %216 = sbr.rel (%p214) target = $region36
    $region35: #{regularize_layer.1} parent=5 // pred_region
      %s217 = ssub.s32 %s7, 2
      // Predicated region
      $region37: #{regularize_layer.1} parent=35 // pred_check
        %p218 = pneg %p76
      $region38: #{regularize_layer.1} parent=35 // pred_check_branch
        %220 = sbr.rel (%p218) target = $region40
      $region39: #{regularize_layer.1} parent=35 // pred_region
        %p221 = scmp.lt.s32.totalorder %s18, 1
        %s222 = scalar_select %p221, %s18, 1
        %s223 = smul.addr %s222, 4
        %s224 = smul.addr %s223, 8
        %s225 = scalar_lea.vmem %s1, %s224
      $region40: #{regularize_layer.1} parent=35 // pred_fallthru
        _
    $region36: #{regularize_layer.1} parent=5 // pred_fallthru
      _
  $region6: #{regularize_layer.1} parent=0 // loop_footer
    %s11 = sadd.s32 1, %s7
  $region7: #{regularize_layer.1} parent=0 // loop_footer_branch
    %6 = sbr.rel target = $region3
  $region8: #{regularize_layer.1} parent=0 // loop_exit
    _

</llo_original>
